<compile_context>
chip_gen: v7x
topology: tpu7x:2x2x1
jax: 0.10.0
libtpu: 0.0.40
codegen_flags: <defaults>
</compile_context>

<pallas_src>
import numpy as np
import jax
import jax.numpy as jnp
from jax.experimental import pallas as pl
from jax.experimental.pallas import tpu as pltpu


# ------------------------------ shared helpers -------------------------------

def _elu(x):
    # torch nn.ELU (alpha=1): x if x>0 else exp(x)-1.  Clamp the exp argument so
    # the discarded branch never overflows.
    return jnp.where(x > 0, x, jnp.exp(jnp.minimum(x, 0.0)) - 1.0)


# --------------------------------- kernel ------------------------------------

def make_block_mlp_kernel(num_layers):
    """Kernel refs: x, (w_0, b_0, ..., w_{L-1}, b_{L-1}), out.

    x/out: (n_blocks, bs_tile, block_dim)
    w_l:   (n_blocks, d_in_l, d_out_l)
    b_l:   (n_blocks, 1, d_out_l)
    """

    def kernel(*refs):
        x_ref = refs[0]
        param_refs = refs[1:1 + 2 * num_layers]
        out_ref = refs[1 + 2 * num_layers]

        x = x_ref[...]                       # (n_blocks, bs_tile, block_dim)
        h = x
        for l in range(num_layers):          # unrolled at trace time (few layers)
            w = param_refs[2 * l][...]       # (n_blocks, d_in, d_out)
            b = param_refs[2 * l + 1][...]   # (n_blocks, 1, d_out)
            # One batched matmul over all blocks (replaces the per-block bmm loop).
            h = jax.lax.dot_general(
                h, w,
                dimension_numbers=(((2,), (1,)), ((0,), (0,))),
                preferred_element_type=jnp.float32) + b
            if l != num_layers - 1:
                h = _elu(h)

        out_ref[...] = h + x                 # residual

    return kernel


# --------------------------------- wrapper ------------------------------------

def block_mlp(x, weights, biases, *, block_dim, batch_tile=None):
    """x: (bs, input_dim) f32.  weights[l]: (n_blocks, d_in, d_out), biases[l]: (n_blocks, 1, d_out)."""
    bs, input_dim = x.shape
    assert input_dim % block_dim == 0, "input_dim must be divisible by block_dim"
    n_blocks = input_dim // block_dim
    num_layers = len(weights)
    assert num_layers == len(biases)
    assert weights[0].shape == (n_blocks, block_dim, weights[0].shape[2])
    assert weights[-1].shape[-1] == block_dim, "residual requires layer_dims[-1] == layer_dims[0]"

    # torch: x.view(bs, n_blocks, block_dim).transpose(0, 1)  ->  (n_blocks, bs, block_dim)
    xb = jnp.transpose(x.reshape(bs, n_blocks, block_dim), (1, 0, 2))

    # Single grid step at small bs (latency-bound regime); tile the batch only when large.
    if batch_tile is None:
        batch_tile = bs if (bs <= 512 or bs % 8 != 0) else 512
    batch_tile = min(batch_tile, bs)
    assert bs % batch_tile == 0, "bs must be divisible by batch_tile"
    grid = (bs // batch_tile,)

    io_spec = pl.BlockSpec((n_blocks, batch_tile, block_dim), lambda i: (0, i, 0))
    param_specs = []
    flat_params = []
    for w, b in zip(weights, biases):
        param_specs.append(pl.BlockSpec(w.shape, lambda i: (0, 0, 0)))  # resident, fetched once
        param_specs.append(pl.BlockSpec(b.shape, lambda i: (0, 0, 0)))
        flat_params.extend([w, b])

    out = pl.pallas_call(
        make_block_mlp_kernel(num_layers),
        out_shape=jax.ShapeDtypeStruct((n_blocks, bs, block_dim), jnp.float32),
        grid=grid,
        in_specs=[io_spec] + param_specs,
        out_specs=io_spec,
        compiler_params=pltpu.CompilerParams(
            dimension_semantics=("parallel",)),   # batch tiles are independent (v7x megacore)
    )(xb, *flat_params)

    # torch: x.transpose(1, 0).reshape(bs, -1)
    return jnp.transpose(out, (1, 0, 2)).reshape(bs, input_dim)


# ------------------------------ pure-JAX reference ----------------------------

def reference(x, weights, biases, block_dim):
    bs, input_dim = x.shape
    n_blocks = input_dim // block_dim
    h = jnp.transpose(x.reshape(bs, n_blocks, block_dim), (1, 0, 2))
    x0 = h
    for l, (w, b) in enumerate(zip(weights, biases)):
        h = jnp.einsum("nbi,nio->nbo", h, w) + b
        if l != len(weights) - 1:
            h = _elu(h)
    h = h + x0
    return jnp.transpose(h, (1, 0, 2)).reshape(bs, input_dim)


# ----------------------------------- main --------------------------------------

if __name__ == "__main__":
    bs, input_dim = 8, 64
    layer_dims = [16, 32, 16]              # block_dim=16, hidden=32 per block
    block_dim = layer_dims[0]
    n_blocks = input_dim // block_dim      # 4

    rng = jax.random.PRNGKey(0)
    keys = jax.random.split(rng, 1 + 2 * (len(layer_dims) - 1))
    x = jax.random.normal(keys[0], (bs, input_dim), jnp.float32)

    weights, biases = [], []
    for i in range(len(layer_dims) - 1):
        d_in, d_out = layer_dims[i], layer_dims[i + 1]
        w = (jax.random.normal(keys[1 + 2 * i], (n_blocks, d_in, d_out), jnp.float32)
             / np.sqrt(d_in)).astype(jnp.float32)
        b = 0.1 * jax.random.normal(keys[2 + 2 * i], (n_blocks, 1, d_out), jnp.float32)
        weights.append(w)
        biases.append(b)

    out = block_mlp(x, weights, biases, block_dim=block_dim)
    out = jax.block_until_ready(out)

    ref = reference(x, weights, biases, block_dim)
    assert out.shape == (bs, input_dim)
    assert np.allclose(np.asarray(out), np.asarray(ref), atol=1e-4, rtol=1e-4), \
        "Pallas BlockMLP kernel does not match reference"
    print("KERNEL_OK")
</pallas_src>

<mosaic_0001>
module attributes {stable_mosaic.version = 11 : i64} {
  func.func @kernel(%arg0: i32, %arg1: memref<4x8x16xf32, #tpu.memory_space<vmem>>, %arg2: memref<4x16x32xf32, #tpu.memory_space<vmem>>, %arg3: memref<4x1x32xf32, #tpu.memory_space<vmem>>, %arg4: memref<4x32x16xf32, #tpu.memory_space<vmem>>, %arg5: memref<4x1x16xf32, #tpu.memory_space<vmem>>, %arg6: memref<4x8x16xf32, #tpu.memory_space<vmem>>) attributes {dimension_semantics = [#tpu.dimension_semantics<parallel>], iteration_bounds = array<i64: 1>, scalar_prefetch = 0 : i64, scratch_operands = 0 : i64, tpu.core_type = #tpu.core_type<tc>, window_params = [{transform_indices = @transform_0, window_bounds = array<i64: 4, 8, 16>}, {pipeline_mode = #tpu.pipeline_mode<synchronous>, transform_indices = @transform_1, window_bounds = array<i64: 4, 16, 32>}, {pipeline_mode = #tpu.pipeline_mode<synchronous>, transform_indices = @transform_2, window_bounds = array<i64: 4, 1, 32>}, {pipeline_mode = #tpu.pipeline_mode<synchronous>, transform_indices = @transform_3, window_bounds = array<i64: 4, 32, 16>}, {pipeline_mode = #tpu.pipeline_mode<synchronous>, transform_indices = @transform_4, window_bounds = array<i64: 4, 1, 16>}, {transform_indices = @transform_5, window_bounds = array<i64: 4, 8, 16>}]} {
    %c0 = arith.constant 0 : index
    %c0_0 = arith.constant 0 : index
    %c0_1 = arith.constant 0 : index
    %0 = vector.load %arg1[%c0, %c0_0, %c0_1] : memref<4x8x16xf32, #tpu.memory_space<vmem>>, vector<4x8x16xf32>
    %c0_2 = arith.constant 0 : index
    %c0_3 = arith.constant 0 : index
    %c0_4 = arith.constant 0 : index
    %1 = vector.load %arg2[%c0_2, %c0_3, %c0_4] : memref<4x16x32xf32, #tpu.memory_space<vmem>>, vector<4x16x32xf32>
    %c0_5 = arith.constant 0 : index
    %c0_6 = arith.constant 0 : index
    %c0_7 = arith.constant 0 : index
    %2 = vector.load %arg3[%c0_5, %c0_6, %c0_7] : memref<4x1x32xf32, #tpu.memory_space<vmem>>, vector<4x1x32xf32>
    %cst = arith.constant dense<0.000000e+00> : vector<4x8x32xf32>
    %3 = tpu.matmul %0, %1, %cst {dimension_numbers = #tpu.dot_dimension_numbers<[2], [1], [1], [2], [0, 0, 0, 1, 1, 2], [0], [0]>} : vector<4x8x16xf32>, vector<4x16x32xf32>, vector<4x8x32xf32> -> vector<4x8x32xf32>
    %4 = vector.broadcast %2 : vector<4x1x32xf32> to vector<4x8x32xf32>
    %5 = arith.addf %3, %4 : vector<4x8x32xf32>
    %cst_8 = arith.constant 0.000000e+00 : f32
    %6 = vector.broadcast %cst_8 : f32 to vector<4x8x32xf32>
    %7 = arith.cmpf ogt, %5, %6 : vector<4x8x32xf32>
    %cst_9 = arith.constant 0.000000e+00 : f32
    %8 = vector.broadcast %cst_9 : f32 to vector<4x8x32xf32>
    %9 = arith.minimumf %5, %8 : vector<4x8x32xf32>
    %10 = math.exp %9 : vector<4x8x32xf32>
    %cst_10 = arith.constant 1.000000e+00 : f32
    %11 = vector.broadcast %cst_10 : f32 to vector<4x8x32xf32>
    %12 = arith.subf %10, %11 : vector<4x8x32xf32>
    %13 = arith.select %7, %5, %12 : vector<4x8x32xi1>, vector<4x8x32xf32>
    %c0_11 = arith.constant 0 : index
    %c0_12 = arith.constant 0 : index
    %c0_13 = arith.constant 0 : index
    %14 = vector.load %arg4[%c0_11, %c0_12, %c0_13] : memref<4x32x16xf32, #tpu.memory_space<vmem>>, vector<4x32x16xf32>
    %c0_14 = arith.constant 0 : index
    %c0_15 = arith.constant 0 : index
    %c0_16 = arith.constant 0 : index
    %15 = vector.load %arg5[%c0_14, %c0_15, %c0_16] : memref<4x1x16xf32, #tpu.memory_space<vmem>>, vector<4x1x16xf32>
    %cst_17 = arith.constant dense<0.000000e+00> : vector<4x8x16xf32>
    %16 = tpu.matmul %13, %14, %cst_17 {dimension_numbers = #tpu.dot_dimension_numbers<[2], [1], [1], [2], [0, 0, 0, 1, 1, 2], [0], [0]>} : vector<4x8x32xf32>, vector<4x32x16xf32>, vector<4x8x16xf32> -> vector<4x8x16xf32>
    %17 = vector.broadcast %15 : vector<4x1x16xf32> to vector<4x8x16xf32>
    %18 = arith.addf %16, %17 : vector<4x8x16xf32>
    %19 = arith.addf %18, %0 : vector<4x8x16xf32>
    %c0_18 = arith.constant 0 : index
    %c0_19 = arith.constant 0 : index
    %c0_20 = arith.constant 0 : index
    %20 = vector.load %arg6[%c0_18, %c0_19, %c0_20] : memref<4x8x16xf32, #tpu.memory_space<vmem>>, vector<4x8x16xf32>
    tpu.vector_store %arg6[%c0_18, %c0_19, %c0_20], %19 {strides = array<i32>} : memref<4x8x16xf32, #tpu.memory_space<vmem>>, vector<4x8x16xf32>,
    return
  }
  func.func @transform_0(%arg0: i32) -> (i32, i32, i32) {
    %c0_i32 = arith.constant 0 : i32
    %c0_i32_0 = arith.constant 0 : i32
    %c0_i32_1 = arith.constant 0 : i32
    return %c0_i32, %arg0, %c0_i32_0 : i32, i32, i32
  }
  func.func @transform_1(%arg0: i32) -> (i32, i32, i32) {
    %c0_i32 = arith.constant 0 : i32
    %c0_i32_0 = arith.constant 0 : i32
    %c0_i32_1 = arith.constant 0 : i32
    %c0_i32_2 = arith.constant 0 : i32
    return %c0_i32, %c0_i32_0, %c0_i32_1 : i32, i32, i32
  }
  func.func @transform_2(%arg0: i32) -> (i32, i32, i32) {
    %c0_i32 = arith.constant 0 : i32
    %c0_i32_0 = arith.constant 0 : i32
    %c0_i32_1 = arith.constant 0 : i32
    %c0_i32_2 = arith.constant 0 : i32
    return %c0_i32, %c0_i32_0, %c0_i32_1 : i32, i32, i32
  }
  func.func @transform_3(%arg0: i32) -> (i32, i32, i32) {
    %c0_i32 = arith.constant 0 : i32
    %c0_i32_0 = arith.constant 0 : i32
    %c0_i32_1 = arith.constant 0 : i32
    %c0_i32_2 = arith.constant 0 : i32
    return %c0_i32, %c0_i32_0, %c0_i32_1 : i32, i32, i32
  }
  func.func @transform_4(%arg0: i32) -> (i32, i32, i32) {
    %c0_i32 = arith.constant 0 : i32
    %c0_i32_0 = arith.constant 0 : i32
    %c0_i32_1 = arith.constant 0 : i32
    %c0_i32_2 = arith.constant 0 : i32
    return %c0_i32, %c0_i32_0, %c0_i32_1 : i32, i32, i32
  }
  func.func @transform_5(%arg0: i32) -> (i32, i32, i32) {
    %c0_i32 = arith.constant 0 : i32
    %c0_i32_0 = arith.constant 0 : i32
    %c0_i32_1 = arith.constant 0 : i32
    return %c0_i32, %arg0, %c0_i32_0 : i32, i32, i32
  }
}

</mosaic_0001>

<llo_original>
// kernel: tpu_custom_call.1
$region0: #{tpu_custom_call.1}
  #allocation0 [shape = 'u32[]', space=smem, size = 0x4, offset = 0x4, fixed_abs, tag = 'smem constant byte address 0x4 - core index']
  #allocation1 [shape = 'u32[144,128]{1,0:T(1,128)}', space=vmem, size = 0x12000, scoped, tag = 'internal scratch']
  %s0 = inlined_call_operand.vmem [shape: f32[4,8,16], index: 0, kind: input, shape index: {}]
  %s1 = inlined_call_operand.vmem [shape: f32[4,16,32], index: 1, kind: input, shape index: {}]
  %s2 = inlined_call_operand.vmem [shape: f32[4,1,32], index: 2, kind: input, shape index: {}]
  %s3 = inlined_call_operand.vmem [shape: f32[4,32,16], index: 3, kind: input, shape index: {}]
  %s4 = inlined_call_operand.vmem [shape: f32[4,1,16], index: 4, kind: input, shape index: {}]
  %s5 = inlined_call_operand.hbm [shape: f32[4,8,16], index: 5, kind: output, shape index: {}]
  %s6 = sld [smem:[#allocation0]]
  $region30: #{tpu_custom_call.1} parent=0
    _
  %s8 = ssub.s32 1, %s6
  %s9 = scalar_select 0, %s8, %s6
  $region1: #{tpu_custom_call.1} parent=0
    #allocation2 [shape = 'u8[16384]{0}', space=vmem, size = 0x4000, scoped, tag = 'output window, operand 0, single buffered']
    #allocation3 [shape = 's32[1]{0}', space=sflag, size = 0x4, scoped, tag = 'scoped memory for tpu_custom_call.1']
    %10 = vsyncpa [#allocation3], 0
    // Predicated region
    $region2: #{tpu_custom_call.1} parent=1 // pred_check
      _
    $region3: #{tpu_custom_call.1} parent=1 // pred_check_branch
      %12 = sbr.rel (0) target = $region5
    $region4: #{tpu_custom_call.1} parent=1 // pred_region
      _
    $region5: #{tpu_custom_call.1} parent=1 // pred_fallthru
      _
    // Predicated region
    $region6: #{tpu_custom_call.1} parent=1 // pred_check
      _
    $region7: #{tpu_custom_call.1} parent=1 // pred_check_branch
      %14 = sbr.rel (0) target = $region9
    $region8: #{tpu_custom_call.1} parent=1 // pred_region
      _
    $region9: #{tpu_custom_call.1} parent=1 // pred_fallthru
      _
    // Predicated region
    $region10: #{tpu_custom_call.1} parent=1 // pred_check
      _
    $region11: #{tpu_custom_call.1} parent=1 // pred_check_branch
      %16 = sbr.rel (0) target = $region13
    $region12: #{tpu_custom_call.1} parent=1 // pred_region
      _
    $region13: #{tpu_custom_call.1} parent=1 // pred_fallthru
      _
    // Predicated region
    $region14: #{tpu_custom_call.1} parent=1 // pred_check
      _
    $region15: #{tpu_custom_call.1} parent=1 // pred_check_branch
      %18 = sbr.rel (0) target = $region17
    $region16: #{tpu_custom_call.1} parent=1 // pred_region
      _
    $region17: #{tpu_custom_call.1} parent=1 // pred_fallthru
      _
    // Predicated region
    $region18: #{tpu_custom_call.1} parent=1 // pred_check
      _
    $region19: #{tpu_custom_call.1} parent=1 // pred_check_branch
      %20 = sbr.rel (0) target = $region21
    $region20: #{tpu_custom_call.1} parent=1 // pred_region
      _
    $region21: #{tpu_custom_call.1} parent=1 // pred_fallthru
      _
    %v21 = vld [vmem:[%s0] sm:$0xff]
    %v22 = vld [vmem:[%s0 + $0x8] sm:$0xff]
    %v23 = vld [vmem:[%s0 + $0x10] sm:$0xff]
    %v24 = vld [vmem:[%s0 + $0x18] sm:$0xff]
    %v25 = vld [vmem:[%s1] sm:$0xff]
    %v26 = vld [vmem:[%s1 + $0x8] sm:$0xff]
    %v27 = vld [vmem:[%s1 + $0x10] sm:$0xff]
    %v28 = vld [vmem:[%s1 + $0x18] sm:$0xff]
    %v29 = vld [vmem:[%s1 + $0x20] sm:$0xff]
    %v30 = vld [vmem:[%s1 + $0x28] sm:$0xff]
    %v31 = vld [vmem:[%s1 + $0x30] sm:$0xff]
    %v32 = vld [vmem:[%s1 + $0x38] sm:$0xff]
    %v33 = vld [vmem:[%s2] sm:$0x1]
    %v34 = vld [vmem:[%s2 + $0x1] sm:$0x1]
    %v35 = vld [vmem:[%s2 + $0x2] sm:$0x1]
    %v36 = vld [vmem:[%s2 + $0x3] sm:$0x1]
    %v41 = vlaneseq
    %v42 = vshrl.u32 %v41, 7
    %v43 = vsub.s32 0, %v42
    %v44 = vrot.slane %v33, %v43
    %v45 = vlaneseq
    %v46 = vshrl.u32 %v45, 7
    %v47 = vsub.s32 0, %v46
    %v48 = vrot.slane %v34, %v47
    %v49 = vlaneseq
    %v50 = vshrl.u32 %v49, 7
    %v51 = vsub.s32 0, %v50
    %v52 = vrot.slane %v35, %v51
    %v53 = vlaneseq
    %v54 = vshrl.u32 %v53, 7
    %v55 = vsub.s32 0, %v54
    %v56 = vrot.slane %v36, %v55
    %vm61 = vcmask 130048
    %v63 = vsel %vm61, %v21, 0
    %65 = vmatprep.subr.mxu0 0.0
    %66 = vmatpush1.msra.mxu0 %v25
    %67 = vmatprep.subr.mxu0 0.0
    %68 = vmatpush1.msra.mxu0 %v26
    %69 = vmatprep.subr.mxu0 0.0
    %70 = vmatpush1.msra.mxu0 0.0
    %71 = vmatprep.subr.mxu0 0.0
    %72 = vmatpush1.msra.mxu0 0.0
    %73 = vmatprep.subr.mxu0 0.0
    %74 = vmatpush1.msra.mxu0 0.0
    %75 = vmatprep.subr.mxu0 0.0
    %76 = vmatpush1.msra.mxu0 0.0
    %77 = vmatprep.subr.mxu0 0.0
    %78 = vmatpush1.msra.mxu0 0.0
    %79 = vmatprep.subr.mxu0 0.0
    %80 = vmatpush1.msra.mxu0 0.0
    %81 = vmatprep.subr.mxu0 0.0
    %82 = vmatpush1.msra.mxu0 0.0
    %83 = vmatprep.subr.mxu0 0.0
    %84 = vmatpush1.msra.mxu0 0.0
    %85 = vmatprep.subr.mxu0 0.0
    %86 = vmatpush1.msra.mxu0 0.0
    %87 = vmatprep.subr.mxu0 0.0
    %88 = vmatpush1.msra.mxu0 0.0
    %89 = vmatprep.subr.mxu0 0.0
    %90 = vmatpush1.msra.mxu0 0.0
    %91 = vmatprep.subr.mxu0 0.0
    %92 = vmatpush1.msra.mxu0 0.0
    %93 = vmatprep.subr.mxu0 0.0
    %94 = vmatpush1.msra.mxu0 0.0
    %95 = vmatprep.subr.mxu0 0.0
    %96 = vmatpush1.msra.mxu0 0.0
    %97 = vmatprep.subr.mxu0 0.0
    %98 = vmatpush1.msra.mxu0 0.0
    %99 = vmatprep.subr.mxu0 0.0
    %100 = vmatpush1.msra.mxu0 0.0
    %101 = vmatprep.subr.mxu0 0.0
    %102 = vmatpush1.msra.mxu0 0.0
    %103 = vmatprep.subr.mxu0 0.0
    %104 = vmatpush1.msra.mxu0 0.0
    %105 = vmatprep.subr.mxu0 0.0
    %106 = vmatpush1.msra.mxu0 0.0
    %107 = vmatprep.subr.mxu0 0.0
    %108 = vmatpush1.msra.mxu0 0.0
    %109 = vmatprep.subr.mxu0 0.0
    %110 = vmatpush1.msra.mxu0 0.0
    %111 = vmatprep.subr.mxu0 0.0
    %112 = vmatpush1.msra.mxu0 0.0
    %113 = vmatprep.subr.mxu0 0.0
    %114 = vmatpush1.msra.mxu0 0.0
    %115 = vmatprep.subr.mxu0 0.0
    %116 = vmatpush1.msra.mxu0 0.0
    %117 = vmatprep.subr.mxu0 0.0
    %118 = vmatpush1.msra.mxu0 0.0
    %119 = vmatprep.subr.mxu0 0.0
    %120 = vmatpush1.msra.mxu0 0.0
    %121 = vmatprep.subr.mxu0 0.0
    %122 = vmatpush1.msra.mxu0 0.0
    %123 = vmatprep.subr.mxu0 0.0
    %124 = vmatpush1.msra.mxu0 0.0
    %125 = vmatprep.subr.mxu0 0.0
    %126 = vmatpush1.msra.mxu0 0.0
    %127 = vmatprep.subr.mxu0 0.0
    %128 = vmatpush1.msra.mxu0 0.0
    %129 = vmatprep.mubr.f32.mxu0 0.0
    %130 = vmatmul.mubr.f32.gmra.mrb[0].mxu0 %v63
    %v131 = vpop.f32.mrb[0].mxu0
    %v132 = vadd.f32 %v44, %v131
    %v133 = vpop.f32.mrb[0].mxu0
    %134 = vdwg.mxu0
    %v136 = vsel %vm61, %v22, 0
    %138 = vmatprep.subr.mxu0 0.0
    %139 = vmatpush1.msra.mxu0 %v27
    %140 = vmatprep.subr.mxu0 0.0
    %141 = vmatpush1.msra.mxu0 %v28
    %142 = vmatprep.subr.mxu0 0.0
    %143 = vmatpush1.msra.mxu0 0.0
    %144 = vmatprep.subr.mxu0 0.0
    %145 = vmatpush1.msra.mxu0 0.0
    %146 = vmatprep.subr.mxu0 0.0
    %147 = vmatpush1.msra.mxu0 0.0
    %148 = vmatprep.subr.mxu0 0.0
    %149 = vmatpush1.msra.mxu0 0.0
    %150 = vmatprep.subr.mxu0 0.0
    %151 = vmatpush1.msra.mxu0 0.0
    %152 = vmatprep.subr.mxu0 0.0
    %153 = vmatpush1.msra.mxu0 0.0
    %154 = vmatprep.subr.mxu0 0.0
    %155 = vmatpush1.msra.mxu0 0.0
    %156 = vmatprep.subr.mxu0 0.0
    %157 = vmatpush1.msra.mxu0 0.0
    %158 = vmatprep.subr.mxu0 0.0
    %159 = vmatpush1.msra.mxu0 0.0
    %160 = vmatprep.subr.mxu0 0.0
    %161 = vmatpush1.msra.mxu0 0.0
    %162 = vmatprep.subr.mxu0 0.0
    %163 = vmatpush1.msra.mxu0 0.0
    %164 = vmatprep.subr.mxu0 0.0
    %165 = vmatpush1.msra.mxu0 0.0
    %166 = vmatprep.subr.mxu0 0.0
    %167 = vmatpush1.msra.mxu0 0.0
    %168 = vmatprep.subr.mxu0 0.0
    %169 = vmatpush1.msra.mxu0 0.0
    %170 = vmatprep.subr.mxu0 0.0
    %171 = vmatpush1.msra.mxu0 0.0
    %172 = vmatprep.subr.mxu0 0.0
    %173 = vmatpush1.msra.mxu0 0.0
    %174 = vmatprep.subr.mxu0 0.0
    %175 = vmatpush1.msra.mxu0 0.0
    %176 = vmatprep.subr.mxu0 0.0
    %177 = vmatpush1.msra.mxu0 0.0
    %178 = vmatprep.subr.mxu0 0.0
    %179 = vmatpush1.msra.mxu0 0.0
    %180 = vmatprep.subr.mxu0 0.0
    %181 = vmatpush1.msra.mxu0 0.0
    %182 = vmatprep.subr.mxu0 0.0
    %183 = vmatpush1.msra.mxu0 0.0
    %184 = vmatprep.subr.mxu0 0.0
    %185 = vmatpush1.msra.mxu0 0.0
    %186 = vmatprep.subr.mxu0 0.0
    %187 = vmatpush1.msra.mxu0 0.0
    %188 = vmatprep.subr.mxu0 0.0
    %189 = vmatpush1.msra.mxu0 0.0
    %190 = vmatprep.subr.mxu0 0.0
    %191 = vmatpush1.msra.mxu0 0.0
    %192 = vmatprep.subr.mxu0 0.0
    %193 = vmatpush1.msra.mxu0 0.0
    %194 = vmatprep.subr.mxu0 0.0
    %195 = vmatpush1.msra.mxu0 0.0
    %196 = vmatprep.subr.mxu0 0.0
    %197 = vmatpush1.msra.mxu0 0.0
    %198 = vmatprep.subr.mxu0 0.0
    %199 = vmatpush1.msra.mxu0 0.0
    %200 = vmatprep.subr.mxu0 0.0
    %201 = vmatpush1.msra.mxu0 0.0
    %202 = vmatprep.mubr.f32.mxu0 0.0
    %203 = vmatmul.mubr.f32.gmra.mrb[0].mxu0 %v136
    %v204 = vpop.f32.mrb[0].mxu0
    %v205 = vadd.f32 %v48, %v204
    %v206 = vpop.f32.mrb[0].mxu0
    %207 = vdwg.mxu0
    %v209 = vsel %vm61, %v23, 0
    %211 = vmatprep.subr.mxu0 0.0
    %212 = vmatpush1.msra.mxu0 %v29
    %213 = vmatprep.subr.mxu0 0.0
    %214 = vmatpush1.msra.mxu0 %v30
    %215 = vmatprep.subr.mxu0 0.0
    %216 = vmatpush1.msra.mxu0 0.0
    %217 = vmatprep.subr.mxu0 0.0
    %218 = vmatpush1.msra.mxu0 0.0
    %219 = vmatprep.subr.mxu0 0.0
    %220 = vmatpush1.msra.mxu0 0.0
    %221 = vmatprep.subr.mxu0 0.0
    %222 = vmatpush1.msra.mxu0 0.0
    %223 = vmatprep.subr.mxu0 0.0
    %224 = vmatpush1.msra.mxu0 0.0
    %225 = vmatprep.subr.mxu0 0.0
    %226 = vmatpush1.msra.mxu0 0.0
    %227 = vmatprep.subr.mxu0 0.0
    %228 = vmatpush1.msra.mxu0 0.0
    %229 = vmatprep.subr.mxu0 0.0
    %230 = vmatpush1.msra.mxu0 0.0
    %231 = vmatprep.subr.mxu0 0.0
    %232 = vmatpush1.msra.mxu0 0.0
    %233 = vmatprep.subr.mxu0 0.0
    %234 = vmatpush1.msra.mxu0 0.0
    %235 = vmatprep.subr.mxu0 0.0
    %236 = vmatpush1.msra.mxu0 0.0
    %237 = vmatprep.subr.mxu0 0.0
    %238 = vmatpush1.msra.mxu0 0.0
    %239 = vmatprep.subr.mxu0 0.0
    %240 = vmatpush1.msra.mxu0 0.0
    %241 = vmatprep.subr.mxu0 0.0
    %242 = vmatpush1.msra.mxu0 0.0
    %243 = vmatprep.subr.mxu0 0.0
    %244 = vmatpush1.msra.mxu0 0.0
    %245 = vmatprep.subr.mxu0 0.0
    %246 = vmatpush1.msra.mxu0 0.0
    %247 = vmatprep.subr.mxu0 0.0
    %248 = vmatpush1.msra.mxu0 0.0
    %249 = vmatprep.subr.mxu0 0.0
    %250 = vmatpush1.msra.mxu0 0.0
    %251 = vmatprep.subr.mxu0 0.0
    %252 = vmatpush1.msra.mxu0 0.0
    %253 = vmatprep.subr.mxu0 0.0
    %254 = vmatpush1.msra.mxu0 0.0
    %255 = vmatprep.subr.mxu0 0.0
    %256 = vmatpush1.msra.mxu0 0.0
    %257 = vmatprep.subr.mxu0 0.0
    %258 = vmatpush1.msra.mxu0 0.0
    %259 = vmatprep.subr.mxu0 0.0
    %260 = vmatpush1.msra.mxu0 0.0
    %261 = vmatprep.subr.mxu0 0.0
    %262 = vmatpush1.msra.mxu0 0.0
    %263 = vmatprep.subr.mxu0 0.0
    %264 = vmatpush1.msra.mxu0 0.0
    %265 = vmatprep.subr.mxu0 0.0
    %266 = vmatpush1.msra.mxu0 0.0
    %267 = vmatprep.subr.mxu0 0.0
    %268 = vmatpush1.msra.mxu0 0.0
    %269 = vmatprep.subr.mxu0 0.0
    %270 = vmatpush1.msra.mxu0 0.0
    %271 = vmatprep.subr.mxu0 0.0
    %272 = vmatpush1.msra.mxu0 0.0
    %273 = vmatprep.subr.mxu0 0.0
    %274 = vmatpush1.msra.mxu0 0.0
    %275 = vmatprep.mubr.f32.mxu0 0.0
    %276 = vmatmul.mubr.f32.gmra.mrb[0].mxu0 %v209
    %v277 = vpop.f32.mrb[0].mxu0
    %v278 = vadd.f32 %v52, %v277
    %v279 = vpop.f32.mrb[0].mxu0
    %280 = vdwg.mxu0
    %v282 = vsel %vm61, %v24, 0
    %284 = vmatprep.subr.mxu0 0.0
    %285 = vmatpush1.msra.mxu0 %v31
    %286 = vmatprep.subr.mxu0 0.0
    %287 = vmatpush1.msra.mxu0 %v32
    %288 = vmatprep.subr.mxu0 0.0
    %289 = vmatpush1.msra.mxu0 0.0
    %290 = vmatprep.subr.mxu0 0.0
    %291 = vmatpush1.msra.mxu0 0.0
    %292 = vmatprep.subr.mxu0 0.0
    %293 = vmatpush1.msra.mxu0 0.0
    %294 = vmatprep.subr.mxu0 0.0
    %295 = vmatpush1.msra.mxu0 0.0
    %296 = vmatprep.subr.mxu0 0.0
    %297 = vmatpush1.msra.mxu0 0.0
    %298 = vmatprep.subr.mxu0 0.0
    %299 = vmatpush1.msra.mxu0 0.0
    %300 = vmatprep.subr.mxu0 0.0
    %301 = vmatpush1.msra.mxu0 0.0
    %302 = vmatprep.subr.mxu0 0.0
    %303 = vmatpush1.msra.mxu0 0.0
    %304 = vmatprep.subr.mxu0 0.0
    %305 = vmatpush1.msra.mxu0 0.0
    %306 = vmatprep.subr.mxu0 0.0
    %307 = vmatpush1.msra.mxu0 0.0
    %308 = vmatprep.subr.mxu0 0.0
    %309 = vmatpush1.msra.mxu0 0.0
    %310 = vmatprep.subr.mxu0 0.0
    %311 = vmatpush1.msra.mxu0 0.0
    %312 = vmatprep.subr.mxu0 0.0
    %313 = vmatpush1.msra.mxu0 0.0
    %314 = vmatprep.subr.mxu0 0.0
    %315 = vmatpush1.msra.mxu0 0.0
    %316 = vmatprep.subr.mxu0 0.0
    %317 = vmatpush1.msra.mxu0 0.0
    %318 = vmatprep.subr.mxu0 0.0
    %319 = vmatpush1.msra.mxu0 0.0
    %320 = vmatprep.subr.mxu0 0.0
    %321 = vmatpush1.msra.mxu0 0.0
    %322 = vmatprep.subr.mxu0 0.0
    %323 = vmatpush1.msra.mxu0 0.0
    %324 = vmatprep.subr.mxu0 0.0
    %325 = vmatpush1.msra.mxu0 0.0
    %326 = vmatprep.subr.mxu0 0.0
    %327 = vmatpush1.msra.mxu0 0.0
    %328 = vmatprep.subr.mxu0 0.0
    %329 = vmatpush1.msra.mxu0 0.0
    %330 = vmatprep.subr.mxu0 0.0
    %331 = vmatpush1.msra.mxu0 0.0
    %332 = vmatprep.subr.mxu0 0.0
    %333 = vmatpush1.msra.mxu0 0.0
    %334 = vmatprep.subr.mxu0 0.0
    %335 = vmatpush1.msra.mxu0 0.0
    %336 = vmatprep.subr.mxu0 0.0
    %337 = vmatpush1.msra.mxu0 0.0
    %338 = vmatprep.subr.mxu0 0.0
    %339 = vmatpush1.msra.mxu0 0.0
    %340 = vmatprep.subr.mxu0 0.0
    %341 = vmatpush1.msra.mxu0 0.0
    %342 = vmatprep.subr.mxu0 0.0
    %343 = vmatpush1.msra.mxu0 0.0
    %344 = vmatprep.subr.mxu0 0.0
    %345 = vmatpush1.msra.mxu0 0.0
    %346 = vmatprep.subr.mxu0 0.0
    %347 = vmatpush1.msra.mxu0 0.0
    %348 = vmatprep.mubr.f32.mxu0 0.0
    %349 = vmatmul.mubr.f32.gmra.mrb[0].mxu0 %v282
    %v350 = vpop.f32.mrb[0].mxu0
    %v351 = vadd.f32 %v56, %v350
    %v352 = vpop.f32.mrb[0].mxu0
    %353 = vdwg.mxu0
    %vm354 = vcmp.gt.f32.partialorder %v132, 0.0
    %vm355 = vcmp.gt.f32.partialorder %v205, 0.0
    %vm356 = vcmp.gt.f32.partialorder %v278, 0.0
    %vm357 = vcmp.gt.f32.partialorder %v351, 0.0
    %v358 = vmin.f32 %v132, 0.0
    %v359 = vmin.f32 %v205, 0.0
    %v360 = vmin.f32 %v278, 0.0
    %v361 = vmin.f32 %v351, 0.0
    %v362 = vmul.f32 %v358, 1.442695
    %v363 = vpow.pop %v362
    %v364 = vmul.f32 %v359, 1.442695
    %v365 = vpow.pop %v364
    %v366 = vmul.f32 %v360, 1.442695
    %v367 = vpow.pop %v366
    %v368 = vmul.f32 %v361, 1.442695
    %v369 = vpow.pop %v368
    %v370 = vsub.f32 %v363, 1.0
    %v371 = vsub.f32 %v365, 1.0
    %v372 = vsub.f32 %v367, 1.0
    %v373 = vsub.f32 %v369, 1.0
    %v374 = vsel %vm354, %v132, %v370
    %v375 = vsel %vm355, %v205, %v371
    %v376 = vsel %vm356, %v278, %v372
    %v377 = vsel %vm357, %v351, %v373
    %v378 = vld [vmem:[%s3] sm:$0xff]
    %v379 = vld [vmem:[%s3 + $0x8] sm:$0xff]
    %v380 = vld [vmem:[%s3 + $0x10] sm:$0xff]
    %v381 = vld [vmem:[%s3 + $0x18] sm:$0xff]
    %v382 = vld [vmem:[%s3 + $0x20] sm:$0xff]
    %v383 = vld [vmem:[%s3 + $0x28] sm:$0xff]
    %v384 = vld [vmem:[%s3 + $0x30] sm:$0xff]
    %v385 = vld [vmem:[%s3 + $0x38] sm:$0xff]
    %v386 = vld [vmem:[%s3 + $0x40] sm:$0xff]
    %v387 = vld [vmem:[%s3 + $0x48] sm:$0xff]
    %v388 = vld [vmem:[%s3 + $0x50] sm:$0xff]
    %v389 = vld [vmem:[%s3 + $0x58] sm:$0xff]
    %v390 = vld [vmem:[%s3 + $0x60] sm:$0xff]
    %v391 = vld [vmem:[%s3 + $0x68] sm:$0xff]
    %v392 = vld [vmem:[%s3 + $0x70] sm:$0xff]
    %v393 = vld [vmem:[%s3 + $0x78] sm:$0xff]
    %v394 = vld [vmem:[%s4] sm:$0x1]
    %v395 = vld [vmem:[%s4 + $0x1] sm:$0x1]
    %v396 = vld [vmem:[%s4 + $0x2] sm:$0x1]
    %v397 = vld [vmem:[%s4 + $0x3] sm:$0x1]
    %v402 = vlaneseq
    %v403 = vshrl.u32 %v402, 7
    %v404 = vsub.s32 0, %v403
    %v405 = vrot.slane %v394, %v404
    %v406 = vlaneseq
    %v407 = vshrl.u32 %v406, 7
    %v408 = vsub.s32 0, %v407
    %v409 = vrot.slane %v395, %v408
    %v410 = vlaneseq
    %v411 = vshrl.u32 %v410, 7
    %v412 = vsub.s32 0, %v411
    %v413 = vrot.slane %v396, %v412
    %v414 = vlaneseq
    %v415 = vshrl.u32 %v414, 7
    %v416 = vsub.s32 0, %v415
    %v417 = vrot.slane %v397, %v416
    %vm422 = vcmask 261120
    %v424 = vsel %vm422, %v374, 0
    %426 = vmatprep.subr.mxu0 0.0
    %427 = vmatpush1.msra.mxu0 %v378
    %428 = vmatprep.subr.mxu0 0.0
    %429 = vmatpush1.msra.mxu0 %v379
    %430 = vmatprep.subr.mxu0 0.0
    %431 = vmatpush1.msra.mxu0 %v380
    %432 = vmatprep.subr.mxu0 0.0
    %433 = vmatpush1.msra.mxu0 %v381
    %434 = vmatprep.subr.mxu0 0.0
    %435 = vmatpush1.msra.mxu0 0.0
    %436 = vmatprep.subr.mxu0 0.0
    %437 = vmatpush1.msra.mxu0 0.0
    %438 = vmatprep.subr.mxu0 0.0
    %439 = vmatpush1.msra.mxu0 0.0
    %440 = vmatprep.subr.mxu0 0.0
    %441 = vmatpush1.msra.mxu0 0.0
    %442 = vmatprep.subr.mxu0 0.0
    %443 = vmatpush1.msra.mxu0 0.0
    %444 = vmatprep.subr.mxu0 0.0
    %445 = vmatpush1.msra.mxu0 0.0
    %446 = vmatprep.subr.mxu0 0.0
    %447 = vmatpush1.msra.mxu0 0.0
    %448 = vmatprep.subr.mxu0 0.0
    %449 = vmatpush1.msra.mxu0 0.0
    %450 = vmatprep.subr.mxu0 0.0
    %451 = vmatpush1.msra.mxu0 0.0
    %452 = vmatprep.subr.mxu0 0.0
    %453 = vmatpush1.msra.mxu0 0.0
    %454 = vmatprep.subr.mxu0 0.0
    %455 = vmatpush1.msra.mxu0 0.0
    %456 = vmatprep.subr.mxu0 0.0
    %457 = vmatpush1.msra.mxu0 0.0
    %458 = vmatprep.subr.mxu0 0.0
    %459 = vmatpush1.msra.mxu0 0.0
    %460 = vmatprep.subr.mxu0 0.0
    %461 = vmatpush1.msra.mxu0 0.0
    %462 = vmatprep.subr.mxu0 0.0
    %463 = vmatpush1.msra.mxu0 0.0
    %464 = vmatprep.subr.mxu0 0.0
    %465 = vmatpush1.msra.mxu0 0.0
    %466 = vmatprep.subr.mxu0 0.0
    %467 = vmatpush1.msra.mxu0 0.0
    %468 = vmatprep.subr.mxu0 0.0
    %469 = vmatpush1.msra.mxu0 0.0
    %470 = vmatprep.subr.mxu0 0.0
    %471 = vmatpush1.msra.mxu0 0.0
    %472 = vmatprep.subr.mxu0 0.0
    %473 = vmatpush1.msra.mxu0 0.0
    %474 = vmatprep.subr.mxu0 0.0
    %475 = vmatpush1.msra.mxu0 0.0
    %476 = vmatprep.subr.mxu0 0.0
    %477 = vmatpush1.msra.mxu0 0.0
    %478 = vmatprep.subr.mxu0 0.0
    %479 = vmatpush1.msra.mxu0 0.0
    %480 = vmatprep.subr.mxu0 0.0
    %481 = vmatpush1.msra.mxu0 0.0
    %482 = vmatprep.subr.mxu0 0.0
    %483 = vmatpush1.msra.mxu0 0.0
    %484 = vmatprep.subr.mxu0 0.0
    %485 = vmatpush1.msra.mxu0 0.0
    %486 = vmatprep.subr.mxu0 0.0
    %487 = vmatpush1.msra.mxu0 0.0
    %488 = vmatprep.subr.mxu0 0.0
    %489 = vmatpush1.msra.mxu0 0.0
    %490 = vmatprep.mubr.f32.mxu0 0.0
    %491 = vmatmul.mubr.f32.gmra.mrb[0].mxu0 %v424
    %v492 = vpop.f32.mrb[0].mxu0
    %v493 = vadd.f32 %v405, %v492
    %v494 = vpop.f32.mrb[0].mxu0
    %495 = vdwg.mxu0
    %v497 = vsel %vm422, %v375, 0
    %499 = vmatprep.subr.mxu0 0.0
    %500 = vmatpush1.msra.mxu0 %v382
    %501 = vmatprep.subr.mxu0 0.0
    %502 = vmatpush1.msra.mxu0 %v383
    %503 = vmatprep.subr.mxu0 0.0
    %504 = vmatpush1.msra.mxu0 %v384
    %505 = vmatprep.subr.mxu0 0.0
    %506 = vmatpush1.msra.mxu0 %v385
    %507 = vmatprep.subr.mxu0 0.0
    %508 = vmatpush1.msra.mxu0 0.0
    %509 = vmatprep.subr.mxu0 0.0
    %510 = vmatpush1.msra.mxu0 0.0
    %511 = vmatprep.subr.mxu0 0.0
    %512 = vmatpush1.msra.mxu0 0.0
    %513 = vmatprep.subr.mxu0 0.0
    %514 = vmatpush1.msra.mxu0 0.0
    %515 = vmatprep.subr.mxu0 0.0
    %516 = vmatpush1.msra.mxu0 0.0
    %517 = vmatprep.subr.mxu0 0.0
    %518 = vmatpush1.msra.mxu0 0.0
    %519 = vmatprep.subr.mxu0 0.0
    %520 = vmatpush1.msra.mxu0 0.0
    %521 = vmatprep.subr.mxu0 0.0
    %522 = vmatpush1.msra.mxu0 0.0
    %523 = vmatprep.subr.mxu0 0.0
    %524 = vmatpush1.msra.mxu0 0.0
    %525 = vmatprep.subr.mxu0 0.0
    %526 = vmatpush1.msra.mxu0 0.0
    %527 = vmatprep.subr.mxu0 0.0
    %528 = vmatpush1.msra.mxu0 0.0
    %529 = vmatprep.subr.mxu0 0.0
    %530 = vmatpush1.msra.mxu0 0.0
    %531 = vmatprep.subr.mxu0 0.0
    %532 = vmatpush1.msra.mxu0 0.0
    %533 = vmatprep.subr.mxu0 0.0
    %534 = vmatpush1.msra.mxu0 0.0
    %535 = vmatprep.subr.mxu0 0.0
    %536 = vmatpush1.msra.mxu0 0.0
    %537 = vmatprep.subr.mxu0 0.0
    %538 = vmatpush1.msra.mxu0 0.0
    %539 = vmatprep.subr.mxu0 0.0
    %540 = vmatpush1.msra.mxu0 0.0
    %541 = vmatprep.subr.mxu0 0.0
    %542 = vmatpush1.msra.mxu0 0.0
    %543 = vmatprep.subr.mxu0 0.0
    %544 = vmatpush1.msra.mxu0 0.0
    %545 = vmatprep.subr.mxu0 0.0
    %546 = vmatpush1.msra.mxu0 0.0
    %547 = vmatprep.subr.mxu0 0.0
    %548 = vmatpush1.msra.mxu0 0.0
    %549 = vmatprep.subr.mxu0 0.0
    %550 = vmatpush1.msra.mxu0 0.0
    %551 = vmatprep.subr.mxu0 0.0
    %552 = vmatpush1.msra.mxu0 0.0
    %553 = vmatprep.subr.mxu0 0.0
    %554 = vmatpush1.msra.mxu0 0.0
    %555 = vmatprep.subr.mxu0 0.0
    %556 = vmatpush1.msra.mxu0 0.0
    %557 = vmatprep.subr.mxu0 0.0
    %558 = vmatpush1.msra.mxu0 0.0
    %559 = vmatprep.subr.mxu0 0.0
    %560 = vmatpush1.msra.mxu0 0.0
    %561 = vmatprep.subr.mxu0 0.0
    %562 = vmatpush1.msra.mxu0 0.0
    %563 = vmatprep.mubr.f32.mxu0 0.0
    %564 = vmatmul.mubr.f32.gmra.mrb[0].mxu0 %v497
    %v565 = vpop.f32.mrb[0].mxu0
    %v566 = vadd.f32 %v409, %v565
    %v567 = vpop.f32.mrb[0].mxu0
    %568 = vdwg.mxu0
    %v570 = vsel %vm422, %v376, 0
    %572 = vmatprep.subr.mxu0 0.0
    %573 = vmatpush1.msra.mxu0 %v386
    %574 = vmatprep.subr.mxu0 0.0
    %575 = vmatpush1.msra.mxu0 %v387
    %576 = vmatprep.subr.mxu0 0.0
    %577 = vmatpush1.msra.mxu0 %v388
    %578 = vmatprep.subr.mxu0 0.0
    %579 = vmatpush1.msra.mxu0 %v389
    %580 = vmatprep.subr.mxu0 0.0
    %581 = vmatpush1.msra.mxu0 0.0
    %582 = vmatprep.subr.mxu0 0.0
    %583 = vmatpush1.msra.mxu0 0.0
    %584 = vmatprep.subr.mxu0 0.0
    %585 = vmatpush1.msra.mxu0 0.0
    %586 = vmatprep.subr.mxu0 0.0
    %587 = vmatpush1.msra.mxu0 0.0
    %588 = vmatprep.subr.mxu0 0.0
    %589 = vmatpush1.msra.mxu0 0.0
    %590 = vmatprep.subr.mxu0 0.0
    %591 = vmatpush1.msra.mxu0 0.0
    %592 = vmatprep.subr.mxu0 0.0
    %593 = vmatpush1.msra.mxu0 0.0
    %594 = vmatprep.subr.mxu0 0.0
    %595 = vmatpush1.msra.mxu0 0.0
    %596 = vmatprep.subr.mxu0 0.0
    %597 = vmatpush1.msra.mxu0 0.0
    %598 = vmatprep.subr.mxu0 0.0
    %599 = vmatpush1.msra.mxu0 0.0
    %600 = vmatprep.subr.mxu0 0.0
    %601 = vmatpush1.msra.mxu0 0.0
    %602 = vmatprep.subr.mxu0 0.0
    %603 = vmatpush1.msra.mxu0 0.0
    %604 = vmatprep.subr.mxu0 0.0
    %605 = vmatpush1.msra.mxu0 0.0
    %606 = vmatprep.subr.mxu0 0.0
    %607 = vmatpush1.msra.mxu0 0.0
    %608 = vmatprep.subr.mxu0 0.0
    %609 = vmatpush1.msra.mxu0 0.0
    %610 = vmatprep.subr.mxu0 0.0
    %611 = vmatpush1.msra.mxu0 0.0
    %612 = vmatprep.subr.mxu0 0.0
    %613 = vmatpush1.msra.mxu0 0.0
    %614 = vmatprep.subr.mxu0 0.0
    %615 = vmatpush1.msra.mxu0 0.0
    %616 = vmatprep.subr.mxu0 0.0
    %617 = vmatpush1.msra.mxu0 0.0
    %618 = vmatprep.subr.mxu0 0.0
    %619 = vmatpush1.msra.mxu0 0.0
    %620 = vmatprep.subr.mxu0 0.0
    %621 = vmatpush1.msra.mxu0 0.0
    %622 = vmatprep.subr.mxu0 0.0
    %623 = vmatpush1.msra.mxu0 0.0
    %624 = vmatprep.subr.mxu0 0.0
    %625 = vmatpush1.msra.mxu0 0.0
    %626 = vmatprep.subr.mxu0 0.0
    %627 = vmatpush1.msra.mxu0 0.0
    %628 = vmatprep.subr.mxu0 0.0
    %629 = vmatpush1.msra.mxu0 0.0
    %630 = vmatprep.subr.mxu0 0.0
    %631 = vmatpush1.msra.mxu0 0.0
    %632 = vmatprep.subr.mxu0 0.0
    %633 = vmatpush1.msra.mxu0 0.0
    %634 = vmatprep.subr.mxu0 0.0
    %635 = vmatpush1.msra.mxu0 0.0
    %636 = vmatprep.mubr.f32.mxu0 0.0
    %637 = vmatmul.mubr.f32.gmra.mrb[0].mxu0 %v570
    %v638 = vpop.f32.mrb[0].mxu0
    %v639 = vadd.f32 %v413, %v638
    %v640 = vpop.f32.mrb[0].mxu0
    %641 = vdwg.mxu0
    %v643 = vsel %vm422, %v377, 0
    %645 = vmatprep.subr.mxu0 0.0
    %646 = vmatpush1.msra.mxu0 %v390
    %647 = vmatprep.subr.mxu0 0.0
    %648 = vmatpush1.msra.mxu0 %v391
    %649 = vmatprep.subr.mxu0 0.0
    %650 = vmatpush1.msra.mxu0 %v392
    %651 = vmatprep.subr.mxu0 0.0
    %652 = vmatpush1.msra.mxu0 %v393
    %653 = vmatprep.subr.mxu0 0.0
    %654 = vmatpush1.msra.mxu0 0.0
    %655 = vmatprep.subr.mxu0 0.0
    %656 = vmatpush1.msra.mxu0 0.0
    %657 = vmatprep.subr.mxu0 0.0
    %658 = vmatpush1.msra.mxu0 0.0
    %659 = vmatprep.subr.mxu0 0.0
    %660 = vmatpush1.msra.mxu0 0.0
    %661 = vmatprep.subr.mxu0 0.0
    %662 = vmatpush1.msra.mxu0 0.0
    %663 = vmatprep.subr.mxu0 0.0
    %664 = vmatpush1.msra.mxu0 0.0
    %665 = vmatprep.subr.mxu0 0.0
    %666 = vmatpush1.msra.mxu0 0.0
    %667 = vmatprep.subr.mxu0 0.0
    %668 = vmatpush1.msra.mxu0 0.0
    %669 = vmatprep.subr.mxu0 0.0
    %670 = vmatpush1.msra.mxu0 0.0
    %671 = vmatprep.subr.mxu0 0.0
    %672 = vmatpush1.msra.mxu0 0.0
    %673 = vmatprep.subr.mxu0 0.0
    %674 = vmatpush1.msra.mxu0 0.0
    %675 = vmatprep.subr.mxu0 0.0
    %676 = vmatpush1.msra.mxu0 0.0
    %677 = vmatprep.subr.mxu0 0.0
    %678 = vmatpush1.msra.mxu0 0.0
    %679 = vmatprep.subr.mxu0 0.0
    %680 = vmatpush1.msra.mxu0 0.0
    %681 = vmatprep.subr.mxu0 0.0
    %682 = vmatpush1.msra.mxu0 0.0
    %683 = vmatprep.subr.mxu0 0.0
    %684 = vmatpush1.msra.mxu0 0.0
    %685 = vmatprep.subr.mxu0 0.0
    %686 = vmatpush1.msra.mxu0 0.0
    %687 = vmatprep.subr.mxu0 0.0
    %688 = vmatpush1.msra.mxu0 0.0
    %689 = vmatprep.subr.mxu0 0.0
    %690 = vmatpush1.msra.mxu0 0.0
    %691 = vmatprep.subr.mxu0 0.0
    %692 = vmatpush1.msra.mxu0 0.0
    %693 = vmatprep.subr.mxu0 0.0
    %694 = vmatpush1.msra.mxu0 0.0
    %695 = vmatprep.subr.mxu0 0.0
    %696 = vmatpush1.msra.mxu0 0.0
    %697 = vmatprep.subr.mxu0 0.0
    %698 = vmatpush1.msra.mxu0 0.0
    %699 = vmatprep.subr.mxu0 0.0
    %700 = vmatpush1.msra.mxu0 0.0
    %701 = vmatprep.subr.mxu0 0.0
    %702 = vmatpush1.msra.mxu0 0.0
    %703 = vmatprep.subr.mxu0 0.0
    %704 = vmatpush1.msra.mxu0 0.0
    %705 = vmatprep.subr.mxu0 0.0
    %706 = vmatpush1.msra.mxu0 0.0
    %707 = vmatprep.subr.mxu0 0.0
    %708 = vmatpush1.msra.mxu0 0.0
    %709 = vmatprep.mubr.f32.mxu0 0.0
    %710 = vmatmul.mubr.f32.gmra.mrb[0].mxu0 %v643
    %v711 = vpop.f32.mrb[0].mxu0
    %v712 = vadd.f32 %v417, %v711
    %v713 = vpop.f32.mrb[0].mxu0
    %714 = vdwg.mxu0
    %v715 = vadd.f32 %v493, %v21
    %v716 = vadd.f32 %v566, %v22
    %v717 = vadd.f32 %v639, %v23
    %v718 = vadd.f32 %v712, %v24
    %719 = vst.msk [vmem:[#allocation2] sm:$0xff] %vm61, %v715
    %720 = vst.msk [vmem:[#allocation2 + $0x8] sm:$0xff] %vm61, %v716
    %721 = vst.msk [vmem:[#allocation2 + $0x10] sm:$0xff] %vm61, %v717
    %722 = vst.msk [vmem:[#allocation2 + $0x18] sm:$0xff] %vm61, %v718
    // Predicated region
    $region22: #{tpu_custom_call.1} parent=1 // pred_check
      _
    $region23: #{tpu_custom_call.1} parent=1 // pred_check_branch
      %724 = sbr.rel (0) target = $region25
    $region24: #{tpu_custom_call.1} parent=1 // pred_region
      %s726 = ssub.s32 512, 512
      %727 = vsyncadd [#allocation3], %s726
      %s728 = sshll.u32 [#allocation2], 4
      %s729 = int_to_ptr.vmem [resolvable:$true] %s728
      %734 = dma.vmem_to_hbm [thread:$0]  %s729, 512, %s5, [#allocation3], 128, 128, 8
    $region25: #{tpu_custom_call.1} parent=1 // pred_fallthru
      _
    // Predicated region
    $region26: #{tpu_custom_call.1} parent=1 // pred_check
      _
    $region27: #{tpu_custom_call.1} parent=1 // pred_check_branch
      %736 = sbr.rel (0) target = $region29
    $region28: #{tpu_custom_call.1} parent=1 // pred_region
      %737 = dma.done [#allocation3], 512
    $region29: #{tpu_custom_call.1} parent=1 // pred_fallthru
      _
    %738 = vsyncpa [#allocation3], 1

</llo_original>
